<compile_context>
chip_gen: v6e
topology: v6e:2x2x1
jax: 0.10.0
libtpu: 0.0.40
codegen_flags: <defaults>
</compile_context>

<pallas_src>
import jax
import jax.numpy as jnp
from jax.experimental import pallas as pl
from jax.experimental.pallas import tpu as pltpu


def _row_align(itemsize: int) -> int:
    # Sublane packing requirement: f32 -> 8, bf16/f16 -> 16, int8/fp8 -> 32.
    return 8 * max(1, 4 // itemsize)


def _pick_lanes(total: int):
    # Largest lane width that divides the element count exactly (no padding).
    for lanes in (1024, 512, 256, 128):
        if total % lanes == 0:
            return lanes
    return None


def _round_up(a: int, b: int) -> int:
    return -(-a // b) * b


def _chip_config():
    """Returns (target block bytes per buffer, vmem_limit_bytes or None, min grid steps)."""
    try:
        kind = jax.devices()[0].device_kind.lower()
    except Exception:
        kind = ""
    if "v7" in kind:
        # 4 buffers x 8 MiB = 32 MiB sits exactly at the default scoped-VMEM
        # limit, so raise it explicitly; stay well under 64 MiB physical VMEM.
        return 8 * 1024 * 1024, 48 * 1024 * 1024, 2
    if "v6" in kind:
        return 4 * 1024 * 1024, None, 1  # fits 32 MiB scoped default
    return 2 * 1024 * 1024, None, 1      # v5e / unknown: fits 16 MiB default


def _make_scale_kernel(scale_factor: float):
    def kernel(x_ref, o_ref):
        # Weak-typed Python scalar -> multiply runs in the input dtype.
        o_ref[...] = (x_ref[...] * scale_factor).astype(o_ref.dtype)

    return kernel


def scale_layer(x: jax.Array, scale_factor: float, *, donate: bool = False) -> jax.Array:
    """Elementwise x * scale_factor, matching PyTorch ScaleLayer.forward."""
    orig_shape = x.shape
    dtype = x.dtype
    total = x.size
    if total == 0:
        return x
    if not jnp.issubdtype(dtype, jnp.floating):
        # TODO(synk): integer inputs keep plain-XLA semantics (PyTorch promotes
        # int * float to float); the kernel path is float-only.
        return x * scale_factor

    lanes = _pick_lanes(total)
    if lanes is None:
        # Element count not a multiple of 128: a lane-dense slab would need a
        # full-tensor pad + slice (extra HBM round trips). Plain XLA already
        # runs this elementwise op at the HBM roofline, so use it directly.
        return x * scale_factor

    itemsize = jnp.dtype(dtype).itemsize
    ra = _row_align(itemsize)
    block_bytes, vmem_limit, min_grid = _chip_config()

    rows = total // lanes
    tgt_rows = max(ra, (block_bytes // (lanes * itemsize)) // ra * ra)
    if rows <= tgt_rows:
        block_rows = rows  # single full-extent block (allowed even if not %8)
        if min_grid >= 2 and rows >= 2 * ra:
            # v7x: split so both TensorCores get a grid step to stream.
            block_rows = _round_up(-(-rows // 2), ra)
    else:
        block_rows = tgt_rows
    grid = (pl.cdiv(rows, block_rows),)  # ragged boundary block is masked by Pallas

    x2d = x.reshape(rows, lanes)  # free: contiguous reshape, no data movement

    out2d = pl.pallas_call(
        _make_scale_kernel(scale_factor),
        out_shape=jax.ShapeDtypeStruct((rows, lanes), dtype),
        grid=grid,
        in_specs=[pl.BlockSpec((block_rows, lanes), lambda i: (i, 0))],
        out_specs=pl.BlockSpec((block_rows, lanes), lambda i: (i, 0)),
        input_output_aliases=({0: 0} if donate else {}),
        compiler_params=pltpu.CompilerParams(
            dimension_semantics=("parallel",),
            vmem_limit_bytes=vmem_limit,
        ),
    )(x2d)

    return out2d.reshape(orig_shape)


if __name__ == "__main__":
    key = jax.random.PRNGKey(0)
    x = jax.random.normal(key, (2, 4, 16, 16), dtype=jnp.float32)
    scale_factor = 0.5

    y = scale_layer(x, scale_factor)
    jax.block_until_ready(y)

    # Correctness check against plain-JAX reference.
    y_ref = x * scale_factor
    assert y.shape == x.shape and y.dtype == x.dtype
    assert jnp.allclose(y, y_ref, atol=1e-6, rtol=1e-6)

    print("KERNEL_OK")
</pallas_src>

<mosaic_0001>
module attributes {stable_mosaic.version = 11 : i64} {
  func.func @kernel(%arg0: i32, %arg1: memref<2x1024xf32, #tpu.memory_space<vmem>>, %arg2: memref<2x1024xf32, #tpu.memory_space<vmem>>) attributes {dimension_semantics = [#tpu.dimension_semantics<parallel>], iteration_bounds = array<i64: 1>, scalar_prefetch = 0 : i64, scratch_operands = 0 : i64, tpu.core_type = #tpu.core_type<tc>, window_params = [{transform_indices = @transform_0, window_bounds = array<i64: 2, 1024>}, {transform_indices = @transform_1, window_bounds = array<i64: 2, 1024>}]} {
    %c0 = arith.constant 0 : index
    %c0_0 = arith.constant 0 : index
    %0 = vector.load %arg1[%c0, %c0_0] : memref<2x1024xf32, #tpu.memory_space<vmem>>, vector<2x1024xf32>
    %cst = arith.constant 5.000000e-01 : f32
    %1 = vector.broadcast %cst : f32 to vector<2x1024xf32>
    %2 = arith.mulf %0, %1 : vector<2x1024xf32>
    %c0_1 = arith.constant 0 : index
    %c0_2 = arith.constant 0 : index
    %3 = vector.load %arg2[%c0_1, %c0_2] : memref<2x1024xf32, #tpu.memory_space<vmem>>, vector<2x1024xf32>
    tpu.vector_store %arg2[%c0_1, %c0_2], %2 {strides = array<i32>} : memref<2x1024xf32, #tpu.memory_space<vmem>>, vector<2x1024xf32>,
    return
  }
  func.func @transform_0(%arg0: i32) -> (i32, i32) {
    %c0_i32 = arith.constant 0 : i32
    %c0_i32_0 = arith.constant 0 : i32
    return %arg0, %c0_i32 : i32, i32
  }
  func.func @transform_1(%arg0: i32) -> (i32, i32) {
    %c0_i32 = arith.constant 0 : i32
    %c0_i32_0 = arith.constant 0 : i32
    return %arg0, %c0_i32 : i32, i32
  }
}

</mosaic_0001>

<llo_original>
// kernel: tpu_custom_call.1
$region0: #{tpu_custom_call.1}
  #allocation0 [shape = 'u32[]', space=smem, size = 0x4, offset = 0x4, fixed_abs, tag = 'smem constant byte address 0x4 - core index']
  #allocation1 [shape = 'u32[144,128]{1,0:T(1,128)}', space=vmem, size = 0x12000, scoped, tag = 'internal scratch']
  %s0 = inlined_call_operand.hbm [shape: f32[2,1024], index: 0, kind: input, shape index: {}]
  %s1 = inlined_call_operand.hbm [shape: f32[2,1024], index: 1, kind: output, shape index: {}]
  %s2 = sld [smem:[#allocation0]]
  $region18: #{tpu_custom_call.1} parent=0
    _
  %s4 = ssub.s32 1, %s2
  %s5 = scalar_select 0, %s4, %s2
  $region1: #{tpu_custom_call.1} parent=0
    #allocation2 [shape = 'u8[8192]{0}', space=vmem, size = 0x2000, scoped, tag = 'input window, operand 0, single buffered']
    #allocation3 [shape = 's32[1]{0}', space=sflag, size = 0x4, scoped, tag = 'scoped memory for tpu_custom_call.1']
    #allocation4 [shape = 's32[1]{0}', space=sflag, size = 0x4, scoped, tag = 'scoped memory for tpu_custom_call.1']
    #allocation5 [shape = 'u8[8192]{0}', space=vmem, size = 0x2000, scoped, tag = 'output window, operand 0, single buffered']
    %6 = vsyncpa [#allocation3], 0
    %7 = vsyncpa [#allocation4], 0
    // Predicated region
    $region2: #{tpu_custom_call.1} parent=1 // pred_check
      _
    $region3: #{tpu_custom_call.1} parent=1 // pred_check_branch
      %9 = sbr.rel (0) target = $region5
    $region4: #{tpu_custom_call.1} parent=1 // pred_region
      %s11 = ssub.s32 256, 256
      %12 = vsyncadd [#allocation3], %s11
      %s14 = sshll.u32 [#allocation2], 4
      %s15 = int_to_ptr.vmem [resolvable:$true] %s14
      %17 = dma.hbm_to_vmem [thread:$0]  %s0, 256, %s15, [#allocation3]
    $region5: #{tpu_custom_call.1} parent=1 // pred_fallthru
      _
    // Predicated region
    $region6: #{tpu_custom_call.1} parent=1 // pred_check
      _
    $region7: #{tpu_custom_call.1} parent=1 // pred_check_branch
      %19 = sbr.rel (0) target = $region9
    $region8: #{tpu_custom_call.1} parent=1 // pred_region
      %20 = dma.done [#allocation3], 256
    $region9: #{tpu_custom_call.1} parent=1 // pred_fallthru
      _
    %v21 = vld [vmem:[#allocation2] sm:$0xff]
    %v22 = vld [vmem:[#allocation2 + $0x8] sm:$0xff]
    %v23 = vmul.f32 %v21, 0.5
    %v24 = vmul.f32 %v22, 0.5
    %25 = vst [vmem:[#allocation5] sm:$0xff] %v23
    %26 = vst [vmem:[#allocation5 + $0x8] sm:$0xff] %v24
    // Predicated region
    $region10: #{tpu_custom_call.1} parent=1 // pred_check
      _
    $region11: #{tpu_custom_call.1} parent=1 // pred_check_branch
      %28 = sbr.rel (0) target = $region13
    $region12: #{tpu_custom_call.1} parent=1 // pred_region
      %s30 = ssub.s32 256, 256
      %31 = vsyncadd [#allocation4], %s30
      %s33 = sshll.u32 [#allocation5], 4
      %s34 = int_to_ptr.vmem [resolvable:$true] %s33
      %36 = dma.vmem_to_hbm [thread:$0]  %s34, 256, %s1, [#allocation4]
    $region13: #{tpu_custom_call.1} parent=1 // pred_fallthru
      _
    // Predicated region
    $region14: #{tpu_custom_call.1} parent=1 // pred_check
      _
    $region15: #{tpu_custom_call.1} parent=1 // pred_check_branch
      %38 = sbr.rel (0) target = $region17
    $region16: #{tpu_custom_call.1} parent=1 // pred_region
      %39 = dma.done [#allocation4], 256
    $region17: #{tpu_custom_call.1} parent=1 // pred_fallthru
      _
    %40 = vsyncpa [#allocation3], 1
    %41 = vsyncpa [#allocation4], 1

</llo_original>
